<compile_context>
chip_gen: v7x
topology: tpu7x:2x2x1
jax: 0.10.0
libtpu: 0.0.40
codegen_flags: <defaults>
</compile_context>

<pallas_src>
import jax
import jax.numpy as jnp
from jax import lax
from jax.experimental import pallas as pl
from jax.experimental.pallas import tpu as pltpu


# ---------------------------------------------------------------------------
# Kernel
# ---------------------------------------------------------------------------
def residual_block_kernel(x_ref, w1_ref, w2_ref, b1_ref, b2_ref,
                          out_ref, xpad_ref, midpad_ref):
    # x_ref      : (Nb*H, W*C)        packed NHWC input rows (lane-dense)
    # w1_ref     : (3, (W+2)*C, W*C)  banded conv1 weight, BN1 scale folded (bf16)
    # w2_ref     : (3, (W+2)*C, W*C)  banded conv2 weight, BN2 scale folded (bf16)
    # b1_ref     : (1, W*C)           folded BN1 bias, packed per-w
    # b2_ref     : (1, W*C)           folded BN2 bias, packed per-w
    # out_ref    : (Nb*H, W*C)
    # xpad_ref   : VMEM (Nb, H+2, (W+2)*C) f32  padded input rows
    # midpad_ref : VMEM (Nb, H+2, (W+2)*C) f32  padded conv1-output rows
    Nb, Hp, WpC = xpad_ref.shape
    H = Hp - 2
    M, WC = out_ref.shape            # M = Nb * H
    C = (WpC - WC) // 2              # (W+2)*C - W*C = 2*C

    # Zero the padded scratches every step.  The halo is tiny and this keeps
    # the kernel independent of grid order, so the batch axis can be
    # "parallel" (megacore-sharded) without an uninitialized-halo hazard.
    xpad_ref[...] = jnp.zeros(xpad_ref.shape, xpad_ref.dtype)
    midpad_ref[...] = jnp.zeros(midpad_ref.shape, midpad_ref.dtype)

    # Scatter the unpadded packed rows into the interior of the padded scratch
    # (sublane offset 1 = top/bottom halo rows, lane offset C = left/right halo
    # columns in the packed (w*C + c) lane layout).
    xpad_ref[:, 1:1 + H, C:C + WC] = x_ref[...].reshape(Nb, H, WC)

    def conv3x3_banded(src_pad_ref, w_ref, bias):
        # One MXU contraction per kh tap.  The tap is a pure ref slice of the
        # padded scratch (no materialized full-padded value, no slab writes);
        # the banded weight does the kw/ci -> co mixing, so the result is
        # already lane-dense (M, W*C).
        acc = None
        for kh in range(3):
            tap = (src_pad_ref[:, kh:kh + H, :]
                   .reshape(M, WpC)
                   .astype(w_ref.dtype))                    # bf16 MXU operand
            part = jnp.dot(tap, w_ref[kh],
                           preferred_element_type=jnp.float32)
            acc = part if acc is None else acc + part
        return acc + bias                                    # f32 bias add

    # conv1 + folded BN1 + ReLU  -> interior of the padded mid scratch.
    h1 = jnp.maximum(conv3x3_banded(xpad_ref, w1_ref, b1_ref[...]), 0.0)
    midpad_ref[:, 1:1 + H, C:C + WC] = h1.reshape(Nb, H, WC)

    # conv2 + folded BN2 + residual + ReLU.  The residual is re-read from
    # x_ref here so the input block is not held live across the matmuls.
    h2 = conv3x3_banded(midpad_ref, w2_ref, b2_ref[...])
    out_ref[...] = jnp.maximum(h2 + x_ref[...], 0.0).astype(out_ref.dtype)


# ---------------------------------------------------------------------------
# Wrapper helpers
# ---------------------------------------------------------------------------
def _round_up(x, m):
    return ((x + m - 1) // m) * m


def _phys_vmem_bytes(shape, dtype):
    """Physical (tiled) VMEM bytes: last dim pads to 128 lanes, second-last to
    the sublane tile (8 rows * 32-bit packing)."""
    itemsize = jnp.dtype(dtype).itemsize
    sublane_tile = 8 * (4 // itemsize)        # 8 for f32, 16 for bf16
    lead = 1
    for d in shape[:-2]:
        lead *= d
    rows = _round_up(shape[-2], sublane_tile)
    lanes = _round_up(shape[-1], 128)
    return lead * rows * lanes * itemsize


def _banded_conv_weight(w_oihw, scale, W):
    """(O,I,3,3) conv weight (with BN scale folded into O) -> banded form
    (3, (W+2)*C, W*C) so that, per kh, a padded packed row-slab
    (M, (W+2)*C) @ banded -> (M, W*C) implements the kw/ci->co mixing."""
    C = w_oihw.shape[0]
    kh, kw, ci, co, wp = jnp.meshgrid(
        jnp.arange(3), jnp.arange(3), jnp.arange(C), jnp.arange(C),
        jnp.arange(W), indexing="ij")
    rows = (wp + kw) * C + ci            # input lane in the padded packed row
    cols = wp * C + co                   # output lane in the packed row
    vals = w_oihw[co, ci, kh, kw] * scale[co]
    wb = jnp.zeros((3, (W + 2) * C, W * C), jnp.float32)
    return wb.at[kh, rows, cols].set(vals)


# ---------------------------------------------------------------------------
# Public entry point
# ---------------------------------------------------------------------------
def residual_block(x_nchw, w1_oihw, w2_oihw, bn1, bn2, eps=1e-5,
                   batch_block=None, mxu_dtype=jnp.bfloat16):
    """PyTorch ResidualBlock forward (eval-mode BatchNorm).

    x_nchw: (N, C, H, W) float32; conv weights OIHW (C, C, 3, 3), bias=False.
    bn1/bn2: (gamma, beta, running_mean, running_var) tuples.
    """
    g1, be1, m1, v1 = bn1
    g2, be2, m2, v2 = bn2
    s1 = g1 / jnp.sqrt(v1 + eps)
    b1 = be1 - m1 * s1
    s2 = g2 / jnp.sqrt(v2 + eps)
    b2 = be2 - m2 * s2

    N, C, H, W = x_nchw.shape
    WC, WpC = W * C, (W + 2) * C

    # NCHW -> packed (N*H, W*C) rows (NHWC with W and C merged onto lanes).
    x_packed = jnp.transpose(x_nchw, (0, 2, 3, 1)).reshape(N * H, WC)

    # Banded, BN-scale-folded, bf16 conv weights + packed f32 biases.
    w1b = _banded_conv_weight(w1_oihw, s1, W).astype(mxu_dtype)
    w2b = _banded_conv_weight(w2_oihw, s2, W).astype(mxu_dtype)
    b1p = jnp.tile(b1, W).reshape(1, WC).astype(jnp.float32)
    b2p = jnp.tile(b2, W).reshape(1, WC).astype(jnp.float32)

    def footprint_bytes(nb):
        m = nb * H
        return (
            2 * _phys_vmem_bytes((nb, H + 2, WpC), jnp.float32)       # scratches
            + 2 * 2 * _phys_vmem_bytes((m, WC), jnp.float32)          # x + out, 2x buffered
            + 2 * 2 * _phys_vmem_bytes((3, WpC, WC), mxu_dtype)       # weights, 2x buffered
            + 2 * 2 * _phys_vmem_bytes((1, WC), jnp.float32))         # biases, 2x buffered

    if batch_block is None:
        budget = 24 << 20          # headroom inside v7x's 64 MiB physical VMEM
        divisors = [d for d in range(1, N + 1) if N % d == 0]
        fitting = [d for d in divisors if footprint_bytes(d) <= budget] or [1]
        # Prefer >= 2 grid steps: gives the pipeline something to overlap and
        # lets v7x's second TensorCore take part of the batch.
        multi_step = [d for d in fitting if N // d >= 2]
        batch_block = max(multi_step) if multi_step else max(fitting)
    Nb = batch_block
    assert N % Nb == 0, "batch_block must divide N"

    vmem_limit = int(min(max(2 * footprint_bytes(Nb), 8 << 20), 48 << 20))

    out_packed = pl.pallas_call(
        residual_block_kernel,
        out_shape=jax.ShapeDtypeStruct((N * H, WC), jnp.float32),
        grid_spec=pltpu.PrefetchScalarGridSpec(
            num_scalar_prefetch=0,
            grid=(N // Nb,),
            in_specs=[
                pl.BlockSpec((Nb * H, WC), lambda n: (n, 0)),
                pl.BlockSpec((3, WpC, WC), lambda n: (0, 0, 0)),
                pl.BlockSpec((3, WpC, WC), lambda n: (0, 0, 0)),
                pl.BlockSpec((1, WC), lambda n: (0, 0)),
                pl.BlockSpec((1, WC), lambda n: (0, 0)),
            ],
            out_specs=pl.BlockSpec((Nb * H, WC), lambda n: (n, 0)),
            scratch_shapes=[
                pltpu.VMEM((Nb, H + 2, WpC), jnp.float32),
                pltpu.VMEM((Nb, H + 2, WpC), jnp.float32),
            ],
        ),
        compiler_params=pltpu.CompilerParams(
            dimension_semantics=("parallel",),
            vmem_limit_bytes=vmem_limit),
    )(x_packed, w1b, w2b, b1p, b2p)

    # packed (N*H, W*C) -> NHWC -> NCHW.
    return jnp.transpose(out_packed.reshape(N, H, W, C), (0, 3, 1, 2))


# ---------------------------------------------------------------------------
# Plain-JAX reference (eval-mode BN), matching the PyTorch module.
# ---------------------------------------------------------------------------
def reference_forward(x, w1, w2, bn1, bn2, eps=1e-5):
    def conv(z, w):
        return lax.conv_general_dilated(
            z, w, window_strides=(1, 1), padding="SAME",
            dimension_numbers=("NCHW", "OIHW", "NCHW"))

    def bn(z, p):
        g, b, m, v = p
        inv = g / jnp.sqrt(v + eps)
        return z * inv[None, :, None, None] + (b - m * inv)[None, :, None, None]

    out = jax.nn.relu(bn(conv(x, w1), bn1))
    out = bn(conv(out, w2), bn2)
    return jax.nn.relu(out + x)


if __name__ == "__main__":
    N, C, H, W = 2, 4, 16, 16
    key = jax.random.PRNGKey(0)
    kx, kw1, kw2, kg1, kb1, km1, kv1, kg2, kb2, km2, kv2 = jax.random.split(key, 11)

    x = jax.random.normal(kx, (N, C, H, W), jnp.float32)
    w1 = jax.random.normal(kw1, (C, C, 3, 3), jnp.float32) * 0.2
    w2 = jax.random.normal(kw2, (C, C, 3, 3), jnp.float32) * 0.2

    bn1 = (1.0 + 0.1 * jax.random.normal(kg1, (C,), jnp.float32),   # gamma
           0.1 * jax.random.normal(kb1, (C,), jnp.float32),         # beta
           0.1 * jax.random.normal(km1, (C,), jnp.float32),         # running_mean
           1.0 + 0.1 * jax.nn.softplus(jax.random.normal(kv1, (C,), jnp.float32)))  # running_var
    bn2 = (1.0 + 0.1 * jax.random.normal(kg2, (C,), jnp.float32),
           0.1 * jax.random.normal(kb2, (C,), jnp.float32),
           0.1 * jax.random.normal(km2, (C,), jnp.float32),
           1.0 + 0.1 * jax.nn.softplus(jax.random.normal(kv2, (C,), jnp.float32)))

    out = jax.block_until_ready(residual_block(x, w1, w2, bn1, bn2))
    ref = jax.block_until_ready(reference_forward(x, w1, w2, bn1, bn2))

    assert out.shape == (N, C, H, W)
    # bf16 MXU operands (f32 accumulation) -> bf16-commensurate tolerance.
    max_err = jnp.max(jnp.abs(out - ref))
    assert jnp.allclose(out, ref, atol=3e-2, rtol=3e-2), f"max abs err {max_err}"

    print("KERNEL_OK")
</pallas_src>

<mosaic_0001>
module attributes {stable_mosaic.version = 11 : i64} {
  func.func @residual_block_kernel(%arg0: i32, %arg1: memref<16x64xf32, #tpu.memory_space<vmem>>, %arg2: memref<3x72x64xbf16, #tpu.memory_space<vmem>>, %arg3: memref<3x72x64xbf16, #tpu.memory_space<vmem>>, %arg4: memref<1x64xf32, #tpu.memory_space<vmem>>, %arg5: memref<1x64xf32, #tpu.memory_space<vmem>>, %arg6: memref<16x64xf32, #tpu.memory_space<vmem>>, %arg7: memref<1x18x72xf32, #tpu.memory_space<vmem>>, %arg8: memref<1x18x72xf32, #tpu.memory_space<vmem>>) attributes {dimension_semantics = [#tpu.dimension_semantics<parallel>], iteration_bounds = array<i64: 2>, scalar_prefetch = 0 : i64, scratch_operands = 2 : i64, tpu.core_type = #tpu.core_type<tc>, window_params = [{transform_indices = @transform_0, window_bounds = array<i64: 16, 64>}, {pipeline_mode = #tpu.pipeline_mode<synchronous>, transform_indices = @transform_1, window_bounds = array<i64: 3, 72, 64>}, {pipeline_mode = #tpu.pipeline_mode<synchronous>, transform_indices = @transform_2, window_bounds = array<i64: 3, 72, 64>}, {pipeline_mode = #tpu.pipeline_mode<synchronous>, transform_indices = @transform_3, window_bounds = array<i64: 1, 64>}, {pipeline_mode = #tpu.pipeline_mode<synchronous>, transform_indices = @transform_4, window_bounds = array<i64: 1, 64>}, {transform_indices = @transform_5, window_bounds = array<i64: 16, 64>}]} {
    %cst = arith.constant 0.000000e+00 : f32
    %0 = vector.broadcast %cst : f32 to vector<1x18x72xf32>
    %c0 = arith.constant 0 : index
    %c0_0 = arith.constant 0 : index
    %c0_1 = arith.constant 0 : index
    %1 = vector.load %arg7[%c0, %c0_0, %c0_1] : memref<1x18x72xf32, #tpu.memory_space<vmem>>, vector<1x18x72xf32>
    tpu.vector_store %arg7[%c0, %c0_0, %c0_1], %0 {strides = array<i32>} : memref<1x18x72xf32, #tpu.memory_space<vmem>>, vector<1x18x72xf32>,
    %cst_2 = arith.constant 0.000000e+00 : f32
    %2 = vector.broadcast %cst_2 : f32 to vector<1x18x72xf32>
    %c0_3 = arith.constant 0 : index
    %c0_4 = arith.constant 0 : index
    %c0_5 = arith.constant 0 : index
    %3 = vector.load %arg8[%c0_3, %c0_4, %c0_5] : memref<1x18x72xf32, #tpu.memory_space<vmem>>, vector<1x18x72xf32>
    tpu.vector_store %arg8[%c0_3, %c0_4, %c0_5], %2 {strides = array<i32>} : memref<1x18x72xf32, #tpu.memory_space<vmem>>, vector<1x18x72xf32>,
    %c0_6 = arith.constant 0 : index
    %c0_7 = arith.constant 0 : index
    %4 = vector.load %arg1[%c0_6, %c0_7] : memref<16x64xf32, #tpu.memory_space<vmem>>, vector<16x64xf32>
    %5 = vector.shape_cast %4 : vector<16x64xf32> to vector<1x16x64xf32>
    %c0_8 = arith.constant 0 : index
    %c1 = arith.constant 1 : index
    %c4 = arith.constant 4 : index
    %6 = vector.load %arg7[%c0_8, %c1, %c4] : memref<1x18x72xf32, #tpu.memory_space<vmem>>, vector<1x16x64xf32>
    tpu.vector_store %arg7[%c0_8, %c1, %c4], %5 {strides = array<i32>} : memref<1x18x72xf32, #tpu.memory_space<vmem>>, vector<1x16x64xf32>,
    %c0_9 = arith.constant 0 : index
    %c0_10 = arith.constant 0 : index
    %7 = vector.load %arg4[%c0_9, %c0_10] : memref<1x64xf32, #tpu.memory_space<vmem>>, vector<1x64xf32>
    %c0_11 = arith.constant 0 : index
    %c0_12 = arith.constant 0 : index
    %c0_13 = arith.constant 0 : index
    %8 = vector.load %arg7[%c0_11, %c0_12, %c0_13] : memref<1x18x72xf32, #tpu.memory_space<vmem>>, vector<1x16x72xf32>
    %9 = vector.shape_cast %8 : vector<1x16x72xf32> to vector<16x72xf32>
    %10 = arith.truncf %9 : vector<16x72xf32> to vector<16x72xbf16>
    %c0_14 = arith.constant 0 : index
    %c0_15 = arith.constant 0 : index
    %c0_16 = arith.constant 0 : index
    %11 = vector.load %arg2[%c0_14, %c0_15, %c0_16] : memref<3x72x64xbf16, #tpu.memory_space<vmem>>, vector<1x72x64xbf16>
    %12 = vector.shape_cast %11 : vector<1x72x64xbf16> to vector<72x64xbf16>
    %cst_17 = arith.constant dense<0.000000e+00> : vector<16x64xf32>
    %13 = tpu.matmul %10, %12, %cst_17 {dimension_numbers = #tpu.dot_dimension_numbers<[1], [0], [0], [1], [0, 0, 1, 1], [], []>} : vector<16x72xbf16>, vector<72x64xbf16>, vector<16x64xf32> -> vector<16x64xf32>
    %c0_18 = arith.constant 0 : index
    %c1_19 = arith.constant 1 : index
    %c0_20 = arith.constant 0 : index
    %14 = vector.load %arg7[%c0_18, %c1_19, %c0_20] : memref<1x18x72xf32, #tpu.memory_space<vmem>>, vector<1x16x72xf32>
    %15 = vector.shape_cast %14 : vector<1x16x72xf32> to vector<16x72xf32>
    %16 = arith.truncf %15 : vector<16x72xf32> to vector<16x72xbf16>
    %c1_21 = arith.constant 1 : index
    %c0_22 = arith.constant 0 : index
    %c0_23 = arith.constant 0 : index
    %17 = vector.load %arg2[%c1_21, %c0_22, %c0_23] : memref<3x72x64xbf16, #tpu.memory_space<vmem>>, vector<1x72x64xbf16>
    %18 = vector.shape_cast %17 : vector<1x72x64xbf16> to vector<72x64xbf16>
    %cst_24 = arith.constant dense<0.000000e+00> : vector<16x64xf32>
    %19 = tpu.matmul %16, %18, %cst_24 {dimension_numbers = #tpu.dot_dimension_numbers<[1], [0], [0], [1], [0, 0, 1, 1], [], []>} : vector<16x72xbf16>, vector<72x64xbf16>, vector<16x64xf32> -> vector<16x64xf32>
    %20 = arith.addf %13, %19 : vector<16x64xf32>
    %c0_25 = arith.constant 0 : index
    %c2 = arith.constant 2 : index
    %c0_26 = arith.constant 0 : index
    %21 = vector.load %arg7[%c0_25, %c2, %c0_26] : memref<1x18x72xf32, #tpu.memory_space<vmem>>, vector<1x16x72xf32>
    %22 = vector.shape_cast %21 : vector<1x16x72xf32> to vector<16x72xf32>
    %23 = arith.truncf %22 : vector<16x72xf32> to vector<16x72xbf16>
    %c2_27 = arith.constant 2 : index
    %c0_28 = arith.constant 0 : index
    %c0_29 = arith.constant 0 : index
    %24 = vector.load %arg2[%c2_27, %c0_28, %c0_29] : memref<3x72x64xbf16, #tpu.memory_space<vmem>>, vector<1x72x64xbf16>
    %25 = vector.shape_cast %24 : vector<1x72x64xbf16> to vector<72x64xbf16>
    %cst_30 = arith.constant dense<0.000000e+00> : vector<16x64xf32>
    %26 = tpu.matmul %23, %25, %cst_30 {dimension_numbers = #tpu.dot_dimension_numbers<[1], [0], [0], [1], [0, 0, 1, 1], [], []>} : vector<16x72xbf16>, vector<72x64xbf16>, vector<16x64xf32> -> vector<16x64xf32>
    %27 = arith.addf %20, %26 : vector<16x64xf32>
    %28 = vector.broadcast %7 : vector<1x64xf32> to vector<16x64xf32>
    %29 = arith.addf %27, %28 : vector<16x64xf32>
    %cst_31 = arith.constant 0.000000e+00 : f32
    %30 = vector.broadcast %cst_31 : f32 to vector<16x64xf32>
    %31 = arith.maximumf %29, %30 : vector<16x64xf32>
    %32 = vector.shape_cast %31 : vector<16x64xf32> to vector<1x16x64xf32>
    %c0_32 = arith.constant 0 : index
    %c1_33 = arith.constant 1 : index
    %c4_34 = arith.constant 4 : index
    %33 = vector.load %arg8[%c0_32, %c1_33, %c4_34] : memref<1x18x72xf32, #tpu.memory_space<vmem>>, vector<1x16x64xf32>
    tpu.vector_store %arg8[%c0_32, %c1_33, %c4_34], %32 {strides = array<i32>} : memref<1x18x72xf32, #tpu.memory_space<vmem>>, vector<1x16x64xf32>,
    %c0_35 = arith.constant 0 : index
    %c0_36 = arith.constant 0 : index
    %34 = vector.load %arg5[%c0_35, %c0_36] : memref<1x64xf32, #tpu.memory_space<vmem>>, vector<1x64xf32>
    %c0_37 = arith.constant 0 : index
    %c0_38 = arith.constant 0 : index
    %c0_39 = arith.constant 0 : index
    %35 = vector.load %arg8[%c0_37, %c0_38, %c0_39] : memref<1x18x72xf32, #tpu.memory_space<vmem>>, vector<1x16x72xf32>
    %36 = vector.shape_cast %35 : vector<1x16x72xf32> to vector<16x72xf32>
    %37 = arith.truncf %36 : vector<16x72xf32> to vector<16x72xbf16>
    %c0_40 = arith.constant 0 : index
    %c0_41 = arith.constant 0 : index
    %c0_42 = arith.constant 0 : index
    %38 = vector.load %arg3[%c0_40, %c0_41, %c0_42] : memref<3x72x64xbf16, #tpu.memory_space<vmem>>, vector<1x72x64xbf16>
    %39 = vector.shape_cast %38 : vector<1x72x64xbf16> to vector<72x64xbf16>
    %cst_43 = arith.constant dense<0.000000e+00> : vector<16x64xf32>
    %40 = tpu.matmul %37, %39, %cst_43 {dimension_numbers = #tpu.dot_dimension_numbers<[1], [0], [0], [1], [0, 0, 1, 1], [], []>} : vector<16x72xbf16>, vector<72x64xbf16>, vector<16x64xf32> -> vector<16x64xf32>
    %c0_44 = arith.constant 0 : index
    %c1_45 = arith.constant 1 : index
    %c0_46 = arith.constant 0 : index
    %41 = vector.load %arg8[%c0_44, %c1_45, %c0_46] : memref<1x18x72xf32, #tpu.memory_space<vmem>>, vector<1x16x72xf32>
    %42 = vector.shape_cast %41 : vector<1x16x72xf32> to vector<16x72xf32>
    %43 = arith.truncf %42 : vector<16x72xf32> to vector<16x72xbf16>
    %c1_47 = arith.constant 1 : index
    %c0_48 = arith.constant 0 : index
    %c0_49 = arith.constant 0 : index
    %44 = vector.load %arg3[%c1_47, %c0_48, %c0_49] : memref<3x72x64xbf16, #tpu.memory_space<vmem>>, vector<1x72x64xbf16>
    %45 = vector.shape_cast %44 : vector<1x72x64xbf16> to vector<72x64xbf16>
    %cst_50 = arith.constant dense<0.000000e+00> : vector<16x64xf32>
    %46 = tpu.matmul %43, %45, %cst_50 {dimension_numbers = #tpu.dot_dimension_numbers<[1], [0], [0], [1], [0, 0, 1, 1], [], []>} : vector<16x72xbf16>, vector<72x64xbf16>, vector<16x64xf32> -> vector<16x64xf32>
    %47 = arith.addf %40, %46 : vector<16x64xf32>
    %c0_51 = arith.constant 0 : index
    %c2_52 = arith.constant 2 : index
    %c0_53 = arith.constant 0 : index
    %48 = vector.load %arg8[%c0_51, %c2_52, %c0_53] : memref<1x18x72xf32, #tpu.memory_space<vmem>>, vector<1x16x72xf32>
    %49 = vector.shape_cast %48 : vector<1x16x72xf32> to vector<16x72xf32>
    %50 = arith.truncf %49 : vector<16x72xf32> to vector<16x72xbf16>
    %c2_54 = arith.constant 2 : index
    %c0_55 = arith.constant 0 : index
    %c0_56 = arith.constant 0 : index
    %51 = vector.load %arg3[%c2_54, %c0_55, %c0_56] : memref<3x72x64xbf16, #tpu.memory_space<vmem>>, vector<1x72x64xbf16>
    %52 = vector.shape_cast %51 : vector<1x72x64xbf16> to vector<72x64xbf16>
    %cst_57 = arith.constant dense<0.000000e+00> : vector<16x64xf32>
    %53 = tpu.matmul %50, %52, %cst_57 {dimension_numbers = #tpu.dot_dimension_numbers<[1], [0], [0], [1], [0, 0, 1, 1], [], []>} : vector<16x72xbf16>, vector<72x64xbf16>, vector<16x64xf32> -> vector<16x64xf32>
    %54 = arith.addf %47, %53 : vector<16x64xf32>
    %55 = vector.broadcast %34 : vector<1x64xf32> to vector<16x64xf32>
    %56 = arith.addf %54, %55 : vector<16x64xf32>
    %c0_58 = arith.constant 0 : index
    %c0_59 = arith.constant 0 : index
    %57 = vector.load %arg1[%c0_58, %c0_59] : memref<16x64xf32, #tpu.memory_space<vmem>>, vector<16x64xf32>
    %58 = arith.addf %56, %57 : vector<16x64xf32>
    %cst_60 = arith.constant 0.000000e+00 : f32
    %59 = vector.broadcast %cst_60 : f32 to vector<16x64xf32>
    %60 = arith.maximumf %58, %59 : vector<16x64xf32>
    %c0_61 = arith.constant 0 : index
    %c0_62 = arith.constant 0 : index
    %61 = vector.load %arg6[%c0_61, %c0_62] : memref<16x64xf32, #tpu.memory_space<vmem>>, vector<16x64xf32>
    tpu.vector_store %arg6[%c0_61, %c0_62], %60 {strides = array<i32>} : memref<16x64xf32, #tpu.memory_space<vmem>>, vector<16x64xf32>,
    return
  }
  func.func @transform_0(%arg0: i32) -> (i32, i32) {
    %c0_i32 = arith.constant 0 : i32
    %c0_i32_0 = arith.constant 0 : i32
    return %arg0, %c0_i32 : i32, i32
  }
  func.func @transform_1(%arg0: i32) -> (i32, i32, i32) {
    %c0_i32 = arith.constant 0 : i32
    %c0_i32_0 = arith.constant 0 : i32
    %c0_i32_1 = arith.constant 0 : i32
    %c0_i32_2 = arith.constant 0 : i32
    return %c0_i32, %c0_i32_0, %c0_i32_1 : i32, i32, i32
  }
  func.func @transform_2(%arg0: i32) -> (i32, i32, i32) {
    %c0_i32 = arith.constant 0 : i32
    %c0_i32_0 = arith.constant 0 : i32
    %c0_i32_1 = arith.constant 0 : i32
    %c0_i32_2 = arith.constant 0 : i32
    return %c0_i32, %c0_i32_0, %c0_i32_1 : i32, i32, i32
  }
  func.func @transform_3(%arg0: i32) -> (i32, i32) {
    %c0_i32 = arith.constant 0 : i32
    %c0_i32_0 = arith.constant 0 : i32
    %c0_i32_1 = arith.constant 0 : i32
    return %c0_i32, %c0_i32_0 : i32, i32
  }
  func.func @transform_4(%arg0: i32) -> (i32, i32) {
    %c0_i32 = arith.constant 0 : i32
    %c0_i32_0 = arith.constant 0 : i32
    %c0_i32_1 = arith.constant 0 : i32
    return %c0_i32, %c0_i32_0 : i32, i32
  }
  func.func @transform_5(%arg0: i32) -> (i32, i32) {
    %c0_i32 = arith.constant 0 : i32
    %c0_i32_0 = arith.constant 0 : i32
    return %arg0, %c0_i32 : i32, i32
  }
}

</mosaic_0001>

<llo_original>
// kernel: tpu_custom_call.1
$region0: #{tpu_custom_call.1}
  #allocation0 [shape = 'u32[]', space=smem, size = 0x4, offset = 0x4, fixed_abs, tag = 'smem constant byte address 0x4 - core index']
  #allocation1 [shape = 'u32[144,128]{1,0:T(1,128)}', space=vmem, size = 0x12000, scoped, tag = 'internal scratch']
  #allocation2 [shape = 'f32[1,18,72]{2,1,0:T(8,128)}', space=vmem, size = 0x3000, scoped, tag = 'scratch operand']
  #allocation3 [shape = 'f32[1,18,72]{2,1,0:T(8,128)}', space=vmem, size = 0x3000, scoped, tag = 'scratch operand']
  %s0 = inlined_call_operand.vmem [shape: f32[32,64], index: 0, kind: input, shape index: {}]
  %s1 = inlined_call_operand.vmem [shape: bf16[3,72,64], index: 1, kind: input, shape index: {}]
  %s2 = inlined_call_operand.vmem [shape: bf16[3,72,64], index: 2, kind: input, shape index: {}]
  %s3 = inlined_call_operand.vmem [shape: f32[1,64], index: 3, kind: input, shape index: {}]
  %s4 = inlined_call_operand.vmem [shape: f32[1,64], index: 4, kind: input, shape index: {}]
  %s5 = inlined_call_operand.hbm [shape: f32[32,64], index: 5, kind: output, shape index: {}]
  %s6 = sld [smem:[#allocation0]]
  $region53: #{tpu_custom_call.1} parent=0
    _
  %s8 = ssub.s32 1, %s6
  %s9 = scalar_select 0, %s8, %s6
  $region1: #{tpu_custom_call.1} parent=0
    #allocation4 [shape = 'u8[16384]{0}', space=vmem, size = 0x4000, scoped, tag = 'output window, operand 0']
    #allocation5 [shape = 's32[2]{0}', space=sflag, size = 0x8, scoped, tag = 'scoped memory for tpu_custom_call.1']
    %10 = vsyncpa [#allocation5], 0
    %s11 = scalar_lea.sflag [#allocation5], 1
    %12 = vsyncpa %s11, 0
    loop: start=0, step=1, limit=4
    $region2: #{tpu_custom_call.1} parent=1 // loop_pre_header
      _
    $region3: #{tpu_custom_call.1} parent=1 // loop_header
      %s14 = sphi 0, %s18
      %p15 = scmp.ge.s32.totalorder %s14, 4
      %s24 = sphi 0, %s26
      %s27 = sphi 0, %s24
      %s28 = sphi 0, %s27
      %s44 = sphi 0, %s28
      %s48 = sphi 0, %s48
      %s50 = sphi 0, %s48
      %s51 = sphi 0, %s50
      %s65 = sphi 0, %s51
      %s69 = sphi 0, %s69
      %s71 = sphi 0, %s69
      %s72 = sphi 0, %s71
      %s86 = sphi 0, %s72
      %s90 = sphi 0, %s90
      %s92 = sphi 0, %s90
      %s93 = sphi 0, %s92
      %s107 = sphi 0, %s93
      %s111 = sphi 0, %s111
      %s113 = sphi 0, %s111
      %s114 = sphi 0, %s113
      %s128 = sphi 0, %s114
      %s134 = sphi 0, %s136
      %s137 = sphi 0, %s134
      %s138 = sphi 0, %s137
      %s154 = sphi 0, %s138
    $region4: #{tpu_custom_call.1} parent=1 // loop_header_branch
      %17 = sbr.rel (%p15) target = $region8
    $region5: #{tpu_custom_call.1} parent=1 // loop_body
      %s19 = ssub.s32 %s14, 1
      %s20 = ssub.s32 %s14, 2
      %s21 = sadd.s32 %s14, 1
      %s22 = ssub.s32 %s14, %s21
      %p23 = scmp.eq.s32.totalorder %s22, 0
      %s25 = sadd.s32 %s24, 1
      %s26 = scalar_select %p23, %s24, %s25
      %p29 = pneg %p23
      %p30 = scmp.eq.s32.totalorder %s14, 1
      %p31 = por %p29, %p30
      %p32 = scmp.ne.s32.totalorder %s24, %s27
      %p33 = scmp.eq.s32.totalorder %s14, 0
      %p34 = por %p32, %p33
      %p35 = scmp.ne.s32.totalorder %s24, %s27
      %p36 = scmp.eq.s32.totalorder %s19, 1
      %p37 = por %p35, %p36
      %p38 = scmp.ne.s32.totalorder %s27, %s28
      %p39 = scmp.eq.s32.totalorder %s19, 0
      %p40 = por %p38, %p39
      %p41 = scmp.ne.s32.totalorder %s27, %s28
      %p42 = scmp.eq.s32.totalorder %s20, 1
      %p43 = por %p41, %p42
      %p45 = scmp.ne.s32.totalorder %s28, %s44
      %p46 = scmp.eq.s32.totalorder %s20, 0
      %p47 = por %p45, %p46
      %s49 = sadd.s32 %s48, 1
      %p52 = scmp.eq.s32.totalorder %s14, 1
      %p53 = scmp.ne.s32.totalorder %s48, %s50
      %p54 = scmp.eq.s32.totalorder %s14, 0
      %p55 = por %p53, %p54
      %p56 = scmp.ne.s32.totalorder %s48, %s50
      %p57 = scmp.eq.s32.totalorder %s19, 1
      %p58 = por %p56, %p57
      %p59 = scmp.ne.s32.totalorder %s50, %s51
      %p60 = scmp.eq.s32.totalorder %s19, 0
      %p61 = por %p59, %p60
      %p62 = scmp.ne.s32.totalorder %s50, %s51
      %p63 = scmp.eq.s32.totalorder %s20, 1
      %p64 = por %p62, %p63
      %p66 = scmp.ne.s32.totalorder %s51, %s65
      %p67 = scmp.eq.s32.totalorder %s20, 0
      %p68 = por %p66, %p67
      %s70 = sadd.s32 %s69, 1
      %p73 = scmp.eq.s32.totalorder %s14, 1
      %p74 = scmp.ne.s32.totalorder %s69, %s71
      %p75 = scmp.eq.s32.totalorder %s14, 0
      %p76 = por %p74, %p75
      %p77 = scmp.ne.s32.totalorder %s69, %s71
      %p78 = scmp.eq.s32.totalorder %s19, 1
      %p79 = por %p77, %p78
      %p80 = scmp.ne.s32.totalorder %s71, %s72
      %p81 = scmp.eq.s32.totalorder %s19, 0
      %p82 = por %p80, %p81
      %p83 = scmp.ne.s32.totalorder %s71, %s72
      %p84 = scmp.eq.s32.totalorder %s20, 1
      %p85 = por %p83, %p84
      %p87 = scmp.ne.s32.totalorder %s72, %s86
      %p88 = scmp.eq.s32.totalorder %s20, 0
      %p89 = por %p87, %p88
      %s91 = sadd.s32 %s90, 1
      %p94 = scmp.eq.s32.totalorder %s14, 1
      %p95 = scmp.ne.s32.totalorder %s90, %s92
      %p96 = scmp.eq.s32.totalorder %s14, 0
      %p97 = por %p95, %p96
      %p98 = scmp.ne.s32.totalorder %s90, %s92
      %p99 = scmp.eq.s32.totalorder %s19, 1
      %p100 = por %p98, %p99
      %p101 = scmp.ne.s32.totalorder %s92, %s93
      %p102 = scmp.eq.s32.totalorder %s19, 0
      %p103 = por %p101, %p102
      %p104 = scmp.ne.s32.totalorder %s92, %s93
      %p105 = scmp.eq.s32.totalorder %s20, 1
      %p106 = por %p104, %p105
      %p108 = scmp.ne.s32.totalorder %s93, %s107
      %p109 = scmp.eq.s32.totalorder %s20, 0
      %p110 = por %p108, %p109
      %s112 = sadd.s32 %s111, 1
      %p115 = scmp.eq.s32.totalorder %s14, 1
      %p116 = scmp.ne.s32.totalorder %s111, %s113
      %p117 = scmp.eq.s32.totalorder %s14, 0
      %p118 = por %p116, %p117
      %p119 = scmp.ne.s32.totalorder %s111, %s113
      %p120 = scmp.eq.s32.totalorder %s19, 1
      %p121 = por %p119, %p120
      %p122 = scmp.ne.s32.totalorder %s113, %s114
      %p123 = scmp.eq.s32.totalorder %s19, 0
      %p124 = por %p122, %p123
      %p125 = scmp.ne.s32.totalorder %s113, %s114
      %p126 = scmp.eq.s32.totalorder %s20, 1
      %p127 = por %p125, %p126
      %p129 = scmp.ne.s32.totalorder %s114, %s128
      %p130 = scmp.eq.s32.totalorder %s20, 0
      %p131 = por %p129, %p130
      %s132 = ssub.s32 %s14, %s21
      %p133 = scmp.eq.s32.totalorder %s132, 0
      %s135 = sadd.s32 %s134, 1
      %s136 = scalar_select %p133, %s134, %s135
      %p139 = pneg %p133
      %p140 = scmp.eq.s32.totalorder %s14, 1
      %p141 = por %p139, %p140
      %p142 = scmp.ne.s32.totalorder %s134, %s137
      %p143 = scmp.eq.s32.totalorder %s14, 0
      %p144 = por %p142, %p143
      %p145 = scmp.ne.s32.totalorder %s134, %s137
      %p146 = scmp.eq.s32.totalorder %s19, 1
      %p147 = por %p145, %p146
      %p148 = scmp.ne.s32.totalorder %s137, %s138
      %p149 = scmp.eq.s32.totalorder %s19, 0
      %p150 = por %p148, %p149
      %p151 = scmp.ne.s32.totalorder %s137, %s138
      %p152 = scmp.eq.s32.totalorder %s20, 1
      %p153 = por %p151, %p152
      %p155 = scmp.ne.s32.totalorder %s138, %s154
      %p156 = scmp.eq.s32.totalorder %s20, 0
      %p157 = por %p155, %p156
      %p158 = scmp.le.s32.totalorder 1, %s14
      %p159 = scmp.lt.s32.totalorder %s14, 3
      %p160 = pnand %p158, %p159
      %p161 = pneg %p160
      // Predicated region
      $region9: #{tpu_custom_call.1} parent=5 // pred_check
        _
      $region10: #{tpu_custom_call.1} parent=5 // pred_check_branch
        %163 = sbr.rel (%p160) target = $region12
      $region11: #{tpu_custom_call.1} parent=5 // pred_region
        %s164 = ssub.s32 %s14, 1
        // Predicated region
        $region13: #{tpu_custom_call.1} parent=11 // pred_check
          %p165 = pneg %p61
        $region14: #{tpu_custom_call.1} parent=11 // pred_check_branch
          %167 = sbr.rel (%p165) target = $region16
        $region15: #{tpu_custom_call.1} parent=11 // pred_region
          _
        $region16: #{tpu_custom_call.1} parent=11 // pred_fallthru
          _
        // Predicated region
        $region17: #{tpu_custom_call.1} parent=11 // pred_check
          %p168 = pneg %p82
        $region18: #{tpu_custom_call.1} parent=11 // pred_check_branch
          %170 = sbr.rel (%p168) target = $region20
        $region19: #{tpu_custom_call.1} parent=11 // pred_region
          _
        $region20: #{tpu_custom_call.1} parent=11 // pred_fallthru
          _
        // Predicated region
        $region21: #{tpu_custom_call.1} parent=11 // pred_check
          %p171 = pneg %p103
        $region22: #{tpu_custom_call.1} parent=11 // pred_check_branch
          %173 = sbr.rel (%p171) target = $region24
        $region23: #{tpu_custom_call.1} parent=11 // pred_region
          _
        $region24: #{tpu_custom_call.1} parent=11 // pred_fallthru
          _
        // Predicated region
        $region25: #{tpu_custom_call.1} parent=11 // pred_check
          %p174 = pneg %p124
        $region26: #{tpu_custom_call.1} parent=11 // pred_check_branch
          %176 = sbr.rel (%p174) target = $region28
        $region27: #{tpu_custom_call.1} parent=11 // pred_region
          _
        $region28: #{tpu_custom_call.1} parent=11 // pred_fallthru
          _
      $region12: #{tpu_custom_call.1} parent=5 // pred_fallthru
        _
      %p177 = scmp.lt.s32.totalorder %s14, 2
      // Predicated region
      $region29: #{tpu_custom_call.1} parent=5 // pred_check
        %p178 = pneg %p177
      $region30: #{tpu_custom_call.1} parent=5 // pred_check_branch
        %180 = sbr.rel (%p178) target = $region32
      $region31: #{tpu_custom_call.1} parent=5 // pred_region
        // Predicated region
        $region33: #{tpu_custom_call.1} parent=31 // pred_check
          %p181 = pneg %p34
        $region34: #{tpu_custom_call.1} parent=31 // pred_check_branch
          %183 = sbr.rel (%p181) target = $region36
        $region35: #{tpu_custom_call.1} parent=31 // pred_region
          %s184 = smul.u32 2, %s14
          %p185 = scmp.lt.s32.totalorder %s184, 3
          %s186 = scalar_select %p185, %s184, 3
          %s187 = smul.addr %s186, 8
          %s188 = scalar_lea.vmem %s0, %s187
          %s189 = smul.u32 2, %s14
        $region36: #{tpu_custom_call.1} parent=31 // pred_fallthru
          _
      $region32: #{tpu_custom_call.1} parent=5 // pred_fallthru
        _
      %p190 = scmp.le.s32.totalorder 1, %s14
      %p191 = scmp.lt.s32.totalorder %s14, 3
      %p192 = pnand %p190, %p191
      %p193 = pneg %p192
      // Predicated region
      $region37: #{tpu_custom_call.1} parent=5 // pred_check
        _
      $region38: #{tpu_custom_call.1} parent=5 // pred_check_branch
        %195 = sbr.rel (%p192) target = $region40
      $region39: #{tpu_custom_call.1} parent=5 // pred_region
        %s196 = ssub.s32 %s14, 1
        %s197 = smul.u32 2, %s19
        %p198 = scmp.lt.s32.totalorder %s197, 3
        %s199 = scalar_select %p198, %s197, 3
        %s200 = smul.addr %s199, 8
        %s201 = scalar_lea.vmem %s0, %s200
        %p202 = pneg %p40
        %p203 = pneg %p37
        %p204 = pneg %p61
        %p205 = pneg %p58
        %p206 = pneg %p82
        %p207 = pneg %p79
        %p208 = pneg %p103
        %p209 = pneg %p100
        %p210 = pneg %p124
        %p211 = pneg %p121
        %p212 = pneg %p150
        %p213 = pneg %p147
        %s214 = sand.u32 %s137, 1
        %s215 = scalar_lea.sflag [#allocation5], %s214
        %s216 = sand.u32 %s137, 1
        %s217 = smul.addr %s216, 16
        %s218 = scalar_lea.vmem [#allocation4], %s217
        %s219 = smul.u32 2, %s19
        %p220 = scmp.lt.s32.totalorder %s219, 3
        %s221 = scalar_select %p220, %s219, 3
        %s222 = smul.addr %s221, 8
        %s223 = scalar_lea.vmem %s0, %s222
        %s224 = smul.u32 2, %s19
        %s225 = smul.u32 2, %s19
        %vm227 = vcmask 588800
        %228 = vst.msk [vmem:[#allocation2] sm:$0xff] %vm227, 0.0
        %229 = vst.msk [vmem:[#allocation2 + $0x8] sm:$0xff] %vm227, 0.0
        %vm230 = vcmask 582656
        %231 = vst.msk [vmem:[#allocation2 + $0x10] sm:$0x3] %vm230, 0.0
        %232 = vst.msk [vmem:[#allocation3] sm:$0xff] %vm227, 0.0
        %233 = vst.msk [vmem:[#allocation3 + $0x8] sm:$0xff] %vm227, 0.0
        %234 = vst.msk [vmem:[#allocation3 + $0x10] sm:$0x3] %vm230, 0.0
        %v235 = vld [vmem:[%s223] sm:$0xff]
        %v236 = vld [vmem:[%s223 + $0x8] sm:$0xff]
        %239 = vrot.lane.b32.xlu0 %v235, 4
        %v240 = vpop.permute.xlu0 %239
        %241 = vrot.lane.b32.xlu0 %v236, 4
        %v242 = vpop.permute.xlu0 %241
        %vm245 = vcmask 556064
        %246 = vst.msk [vmem:[#allocation2 + $0x1] sm:$0xff] %vm245, %v240
        %247 = vst.msk [vmem:[#allocation2 + $0x9] sm:$0xff] %vm245, %v242
        %v248 = vld [vmem:[%s3] sm:$0x1]
        %v249 = vld [vmem:[#allocation2] sm:$0xff]
        %v250 = vld [vmem:[#allocation2 + $0x8] sm:$0xff]
        %v251 = vpack.c.bf16 %v250, %v249
        %v252 = vld [vmem:[%s1] sm:$0xf]
        %v253 = vld [vmem:[%s1 + $0x4] sm:$0xf]
        %v254 = vld [vmem:[%s1 + $0x8] sm:$0xf]
        %v255 = vld [vmem:[%s1 + $0xc] sm:$0xf]
        %v256 = vld [vmem:[%s1 + $0x10] sm:$0xf]
        %v257 = vld [vmem:[%s1 + $0x14] sm:$0xf]
        %v258 = vld [vmem:[%s1 + $0x18] sm:$0xf]
        %v259 = vld [vmem:[%s1 + $0x1c] sm:$0xf]
        %v260 = vld [vmem:[%s1 + $0x20] sm:$0xf]
        %v261 = vld [vmem:[#allocation2 + $0x1] sm:$0xff]
        %v262 = vld [vmem:[#allocation2 + $0x9] sm:$0xff]
        %v263 = vpack.c.bf16 %v262, %v261
        %s264 = scalar_lea.vmem %s1, 36
        %v265 = vld [vmem:[%s264] sm:$0xf]
        %v266 = vld [vmem:[%s264 + $0x4] sm:$0xf]
        %v267 = vld [vmem:[%s264 + $0x8] sm:$0xf]
        %v268 = vld [vmem:[%s264 + $0xc] sm:$0xf]
        %v269 = vld [vmem:[%s264 + $0x10] sm:$0xf]
        %v270 = vld [vmem:[%s264 + $0x14] sm:$0xf]
        %v271 = vld [vmem:[%s264 + $0x18] sm:$0xf]
        %v272 = vld [vmem:[%s264 + $0x1c] sm:$0xf]
        %v273 = vld [vmem:[%s264 + $0x20] sm:$0xf]
        %v283 = vunpack.c.l.b16 %v265
        %v284 = vunpack.c.l.b16 %v266
        %v285 = vunpack.c.l.b16 %v267
        %v286 = vunpack.c.l.b16 %v268
        %v287 = vunpack.c.l.b16 %v269
        %v288 = vunpack.c.l.b16 %v270
        %v289 = vunpack.c.l.b16 %v271
        %v290 = vunpack.c.l.b16 %v272
        %v291 = vunpack.c.l.b16 %v273
        %v292 = vpack.c.b16 %v284, %v283
        %v293 = vpack.c.b16 %v286, %v285
        %v294 = vpack.c.b16 %v288, %v287
        %v295 = vpack.c.b16 %v290, %v289
        %v296 = vpack.c.b16 %v291, %v291
        %v302 = vsel %vm227, %v263, 0
        %vm304 = vcmask 1043456
        %v306 = vsel %vm304, %v296, 0
        %308 = vmatprep.subr.bf16.mxu0 0
        %309 = vmatpush1.bf16.msra.mxu0 %v292
        %310 = vmatprep.subr.bf16.mxu0 0
        %311 = vmatpush1.bf16.msra.mxu0 %v293
        %312 = vmatprep.subr.bf16.mxu0 0
        %313 = vmatpush1.bf16.msra.mxu0 %v294
        %314 = vmatprep.subr.bf16.mxu0 0
        %315 = vmatpush1.bf16.msra.mxu0 %v295
        %316 = vmatprep.subr.bf16.mxu0 0
        %317 = vmatpush1.bf16.msra.mxu0 %v306
        %318 = vmatprep.subr.bf16.mxu0 0
        %319 = vmatpush1.bf16.msra.mxu0 0
        %320 = vmatprep.subr.bf16.mxu0 0
        %321 = vmatpush1.bf16.msra.mxu0 0
        %322 = vmatprep.subr.bf16.mxu0 0
        %323 = vmatpush1.bf16.msra.mxu0 0
        %324 = vmatprep.subr.bf16.mxu0 0
        %325 = vmatpush1.bf16.msra.mxu0 0
        %326 = vmatprep.subr.bf16.mxu0 0
        %327 = vmatpush1.bf16.msra.mxu0 0
        %328 = vmatprep.subr.bf16.mxu0 0
        %329 = vmatpush1.bf16.msra.mxu0 0
        %330 = vmatprep.subr.bf16.mxu0 0
        %331 = vmatpush1.bf16.msra.mxu0 0
        %332 = vmatprep.subr.bf16.mxu0 0
        %333 = vmatpush1.bf16.msra.mxu0 0
        %334 = vmatprep.subr.bf16.mxu0 0
        %335 = vmatpush1.bf16.msra.mxu0 0
        %336 = vmatprep.subr.bf16.mxu0 0
        %337 = vmatpush1.bf16.msra.mxu0 0
        %338 = vmatprep.subr.bf16.mxu0 0
        %339 = vmatpush1.bf16.msra.mxu0 0
        %340 = vmatprep.mubr.bf16.mxu0 0
        %341 = vmatmul.mubr.bf16.gmra.mrb[0].mxu0 %v302
        %v342 = vpop.f32.mrb[0].mxu0
        %v343 = vadd.f32 0.0, %v342
        %v344 = vpop.f32.mrb[0].mxu0
        %v345 = vpop.f32.mrb[0].mxu0
        %v346 = vadd.f32 0.0, %v345
        %v347 = vpop.f32.mrb[0].mxu0
        %348 = vdwg.mxu0
        %v358 = vunpack.c.l.b16 %v252
        %v359 = vunpack.c.l.b16 %v253
        %v360 = vunpack.c.l.b16 %v254
        %v361 = vunpack.c.l.b16 %v255
        %v362 = vunpack.c.l.b16 %v256
        %v363 = vunpack.c.l.b16 %v257
        %v364 = vunpack.c.l.b16 %v258
        %v365 = vunpack.c.l.b16 %v259
        %v366 = vunpack.c.l.b16 %v260
        %v367 = vpack.c.b16 %v359, %v358
        %v368 = vpack.c.b16 %v361, %v360
        %v369 = vpack.c.b16 %v363, %v362
        %v370 = vpack.c.b16 %v365, %v364
        %v371 = vpack.c.b16 %v366, %v366
        %v377 = vsel %vm227, %v251, 0
        %v380 = vsel %vm304, %v371, 0
        %382 = vmatprep.subr.bf16.mxu0 0
        %383 = vmatpush1.bf16.msra.mxu0 %v367
        %384 = vmatprep.subr.bf16.mxu0 0
        %385 = vmatpush1.bf16.msra.mxu0 %v368
        %386 = vmatprep.subr.bf16.mxu0 0
        %387 = vmatpush1.bf16.msra.mxu0 %v369
        %388 = vmatprep.subr.bf16.mxu0 0
        %389 = vmatpush1.bf16.msra.mxu0 %v370
        %390 = vmatprep.subr.bf16.mxu0 0
        %391 = vmatpush1.bf16.msra.mxu0 %v380
        %392 = vmatprep.subr.bf16.mxu0 0
        %393 = vmatpush1.bf16.msra.mxu0 0
        %394 = vmatprep.subr.bf16.mxu0 0
        %395 = vmatpush1.bf16.msra.mxu0 0
        %396 = vmatprep.subr.bf16.mxu0 0
        %397 = vmatpush1.bf16.msra.mxu0 0
        %398 = vmatprep.subr.bf16.mxu0 0
        %399 = vmatpush1.bf16.msra.mxu0 0
        %400 = vmatprep.subr.bf16.mxu0 0
        %401 = vmatpush1.bf16.msra.mxu0 0
        %402 = vmatprep.subr.bf16.mxu0 0
        %403 = vmatpush1.bf16.msra.mxu0 0
        %404 = vmatprep.subr.bf16.mxu0 0
        %405 = vmatpush1.bf16.msra.mxu0 0
        %406 = vmatprep.subr.bf16.mxu0 0
        %407 = vmatpush1.bf16.msra.mxu0 0
        %408 = vmatprep.subr.bf16.mxu0 0
        %409 = vmatpush1.bf16.msra.mxu0 0
        %410 = vmatprep.subr.bf16.mxu0 0
        %411 = vmatpush1.bf16.msra.mxu0 0
        %412 = vmatprep.subr.bf16.mxu0 0
        %413 = vmatpush1.bf16.msra.mxu0 0
        %414 = vmatprep.mubr.bf16.mxu0 0
        %415 = vmatmul.mubr.bf16.gmra.mrb[0].mxu0 %v377
        %v416 = vpop.f32.mrb[0].mxu0
        %v417 = vadd.f32 %v343, %v416
        %v418 = vpop.f32.mrb[0].mxu0
        %v419 = vpop.f32.mrb[0].mxu0
        %v420 = vadd.f32 %v346, %v419
        %v421 = vpop.f32.mrb[0].mxu0
        %422 = vdwg.mxu0
        %v423 = vld [vmem:[#allocation2 + $0x2] sm:$0xff]
        %v424 = vld [vmem:[#allocation2 + $0xa] sm:$0xff]
        %v425 = vpack.c.bf16 %v424, %v423
        %s426 = scalar_lea.vmem %s1, 72
        %v427 = vld [vmem:[%s426] sm:$0xf]
        %v428 = vld [vmem:[%s426 + $0x4] sm:$0xf]
        %v429 = vld [vmem:[%s426 + $0x8] sm:$0xf]
        %v430 = vld [vmem:[%s426 + $0xc] sm:$0xf]
        %v431 = vld [vmem:[%s426 + $0x10] sm:$0xf]
        %v432 = vld [vmem:[%s426 + $0x14] sm:$0xf]
        %v433 = vld [vmem:[%s426 + $0x18] sm:$0xf]
        %v434 = vld [vmem:[%s426 + $0x1c] sm:$0xf]
        %v435 = vld [vmem:[%s426 + $0x20] sm:$0xf]
        %v445 = vunpack.c.l.b16 %v427
        %v446 = vunpack.c.l.b16 %v428
        %v447 = vunpack.c.l.b16 %v429
        %v448 = vunpack.c.l.b16 %v430
        %v449 = vunpack.c.l.b16 %v431
        %v450 = vunpack.c.l.b16 %v432
        %v451 = vunpack.c.l.b16 %v433
        %v452 = vunpack.c.l.b16 %v434
        %v453 = vunpack.c.l.b16 %v435
        %v454 = vpack.c.b16 %v446, %v445
        %v455 = vpack.c.b16 %v448, %v447
        %v456 = vpack.c.b16 %v450, %v449
        %v457 = vpack.c.b16 %v452, %v451
        %v458 = vpack.c.b16 %v453, %v453
        %v464 = vsel %vm227, %v425, 0
        %v467 = vsel %vm304, %v458, 0
        %469 = vmatprep.subr.bf16.mxu0 0
        %470 = vmatpush1.bf16.msra.mxu0 %v454
        %471 = vmatprep.subr.bf16.mxu0 0
        %472 = vmatpush1.bf16.msra.mxu0 %v455
        %473 = vmatprep.subr.bf16.mxu0 0
        %474 = vmatpush1.bf16.msra.mxu0 %v456
        %475 = vmatprep.subr.bf16.mxu0 0
        %476 = vmatpush1.bf16.msra.mxu0 %v457
        %477 = vmatprep.subr.bf16.mxu0 0
        %478 = vmatpush1.bf16.msra.mxu0 %v467
        %479 = vmatprep.subr.bf16.mxu0 0
        %480 = vmatpush1.bf16.msra.mxu0 0
        %481 = vmatprep.subr.bf16.mxu0 0
        %482 = vmatpush1.bf16.msra.mxu0 0
        %483 = vmatprep.subr.bf16.mxu0 0
        %484 = vmatpush1.bf16.msra.mxu0 0
        %485 = vmatprep.subr.bf16.mxu0 0
        %486 = vmatpush1.bf16.msra.mxu0 0
        %487 = vmatprep.subr.bf16.mxu0 0
        %488 = vmatpush1.bf16.msra.mxu0 0
        %489 = vmatprep.subr.bf16.mxu0 0
        %490 = vmatpush1.bf16.msra.mxu0 0
        %491 = vmatprep.subr.bf16.mxu0 0
        %492 = vmatpush1.bf16.msra.mxu0 0
        %493 = vmatprep.subr.bf16.mxu0 0
        %494 = vmatpush1.bf16.msra.mxu0 0
        %495 = vmatprep.subr.bf16.mxu0 0
        %496 = vmatpush1.bf16.msra.mxu0 0
        %497 = vmatprep.subr.bf16.mxu0 0
        %498 = vmatpush1.bf16.msra.mxu0 0
        %499 = vmatprep.subr.bf16.mxu0 0
        %500 = vmatpush1.bf16.msra.mxu0 0
        %501 = vmatprep.mubr.bf16.mxu0 0
        %502 = vmatmul.mubr.bf16.gmra.mrb[0].mxu0 %v464
        %v503 = vpop.f32.mrb[0].mxu0
        %v504 = vadd.f32 0.0, %v503
        %v505 = vpop.f32.mrb[0].mxu0
        %v506 = vpop.f32.mrb[0].mxu0
        %v507 = vadd.f32 0.0, %v506
        %v508 = vpop.f32.mrb[0].mxu0
        %509 = vdwg.mxu0
        %v510 = vadd.f32 %v417, %v504
        %v511 = vadd.f32 %v420, %v507
        %v513 = vlaneseq
        %v514 = vshrl.u32 %v513, 7
        %v515 = vsub.s32 0, %v514
        %v516 = vrot.slane %v248, %v515
        %v518 = vadd.f32 %v510, %v516
        %v519 = vadd.f32 %v511, %v516
        %v520 = vmax.f32 %v518, 0.0
        %v521 = vmax.f32 %v519, 0.0
        %524 = vrot.lane.b32.xlu0 %v520, 4
        %v525 = vpop.permute.xlu0 %524
        %526 = vrot.lane.b32.xlu0 %v521, 4
        %v527 = vpop.permute.xlu0 %526
        %530 = vst.msk [vmem:[#allocation3 + $0x1] sm:$0xff] %vm245, %v525
        %531 = vst.msk [vmem:[#allocation3 + $0x9] sm:$0xff] %vm245, %v527
        %v532 = vld [vmem:[%s4] sm:$0x1]
        %v533 = vld [vmem:[#allocation3] sm:$0xff]
        %v534 = vld [vmem:[#allocation3 + $0x8] sm:$0xff]
        %v535 = vpack.c.bf16 %v534, %v533
        %v536 = vld [vmem:[%s2] sm:$0xf]
        %v537 = vld [vmem:[%s2 + $0x4] sm:$0xf]
        %v538 = vld [vmem:[%s2 + $0x8] sm:$0xf]
        %v539 = vld [vmem:[%s2 + $0xc] sm:$0xf]
        %v540 = vld [vmem:[%s2 + $0x10] sm:$0xf]
        %v541 = vld [vmem:[%s2 + $0x14] sm:$0xf]
        %v542 = vld [vmem:[%s2 + $0x18] sm:$0xf]
        %v543 = vld [vmem:[%s2 + $0x1c] sm:$0xf]
        %v544 = vld [vmem:[%s2 + $0x20] sm:$0xf]
        %v545 = vld [vmem:[#allocation3 + $0x1] sm:$0xff]
        %v546 = vld [vmem:[#allocation3 + $0x9] sm:$0xff]
        %v547 = vpack.c.bf16 %v546, %v545
        %s548 = scalar_lea.vmem %s2, 36
        %v549 = vld [vmem:[%s548] sm:$0xf]
        %v550 = vld [vmem:[%s548 + $0x4] sm:$0xf]
        %v551 = vld [vmem:[%s548 + $0x8] sm:$0xf]
        %v552 = vld [vmem:[%s548 + $0xc] sm:$0xf]
        %v553 = vld [vmem:[%s548 + $0x10] sm:$0xf]
        %v554 = vld [vmem:[%s548 + $0x14] sm:$0xf]
        %v555 = vld [vmem:[%s548 + $0x18] sm:$0xf]
        %v556 = vld [vmem:[%s548 + $0x1c] sm:$0xf]
        %v557 = vld [vmem:[%s548 + $0x20] sm:$0xf]
        %v567 = vunpack.c.l.b16 %v549
        %v568 = vunpack.c.l.b16 %v550
        %v569 = vunpack.c.l.b16 %v551
        %v570 = vunpack.c.l.b16 %v552
        %v571 = vunpack.c.l.b16 %v553
        %v572 = vunpack.c.l.b16 %v554
        %v573 = vunpack.c.l.b16 %v555
        %v574 = vunpack.c.l.b16 %v556
        %v575 = vunpack.c.l.b16 %v557
        %v576 = vpack.c.b16 %v568, %v567
        %v577 = vpack.c.b16 %v570, %v569
        %v578 = vpack.c.b16 %v572, %v571
        %v579 = vpack.c.b16 %v574, %v573
        %v580 = vpack.c.b16 %v575, %v575
        %v586 = vsel %vm227, %v547, 0
        %v589 = vsel %vm304, %v580, 0
        %591 = vmatprep.subr.bf16.mxu0 0
        %592 = vmatpush1.bf16.msra.mxu0 %v576
        %593 = vmatprep.subr.bf16.mxu0 0
        %594 = vmatpush1.bf16.msra.mxu0 %v577
        %595 = vmatprep.subr.bf16.mxu0 0
        %596 = vmatpush1.bf16.msra.mxu0 %v578
        %597 = vmatprep.subr.bf16.mxu0 0
        %598 = vmatpush1.bf16.msra.mxu0 %v579
        %599 = vmatprep.subr.bf16.mxu0 0
        %600 = vmatpush1.bf16.msra.mxu0 %v589
        %601 = vmatprep.subr.bf16.mxu0 0
        %602 = vmatpush1.bf16.msra.mxu0 0
        %603 = vmatprep.subr.bf16.mxu0 0
        %604 = vmatpush1.bf16.msra.mxu0 0
        %605 = vmatprep.subr.bf16.mxu0 0
        %606 = vmatpush1.bf16.msra.mxu0 0
        %607 = vmatprep.subr.bf16.mxu0 0
        %608 = vmatpush1.bf16.msra.mxu0 0
        %609 = vmatprep.subr.bf16.mxu0 0
        %610 = vmatpush1.bf16.msra.mxu0 0
        %611 = vmatprep.subr.bf16.mxu0 0
        %612 = vmatpush1.bf16.msra.mxu0 0
        %613 = vmatprep.subr.bf16.mxu0 0
        %614 = vmatpush1.bf16.msra.mxu0 0
        %615 = vmatprep.subr.bf16.mxu0 0
        %616 = vmatpush1.bf16.msra.mxu0 0
        %617 = vmatprep.subr.bf16.mxu0 0
        %618 = vmatpush1.bf16.msra.mxu0 0
        %619 = vmatprep.subr.bf16.mxu0 0
        %620 = vmatpush1.bf16.msra.mxu0 0
        %621 = vmatprep.subr.bf16.mxu0 0
        %622 = vmatpush1.bf16.msra.mxu0 0
        %623 = vmatprep.mubr.bf16.mxu0 0
        %624 = vmatmul.mubr.bf16.gmra.mrb[0].mxu0 %v586
        %v625 = vpop.f32.mrb[0].mxu0
        %v626 = vadd.f32 0.0, %v625
        %v627 = vpop.f32.mrb[0].mxu0
        %v628 = vpop.f32.mrb[0].mxu0
        %v629 = vadd.f32 0.0, %v628
        %v630 = vpop.f32.mrb[0].mxu0
        %631 = vdwg.mxu0
        %v641 = vunpack.c.l.b16 %v536
        %v642 = vunpack.c.l.b16 %v537
        %v643 = vunpack.c.l.b16 %v538
        %v644 = vunpack.c.l.b16 %v539
        %v645 = vunpack.c.l.b16 %v540
        %v646 = vunpack.c.l.b16 %v541
        %v647 = vunpack.c.l.b16 %v542
        %v648 = vunpack.c.l.b16 %v543
        %v649 = vunpack.c.l.b16 %v544
        %v650 = vpack.c.b16 %v642, %v641
        %v651 = vpack.c.b16 %v644, %v643
        %v652 = vpack.c.b16 %v646, %v645
        %v653 = vpack.c.b16 %v648, %v647
        %v654 = vpack.c.b16 %v649, %v649
        %v660 = vsel %vm227, %v535, 0
        %v663 = vsel %vm304, %v654, 0
        %665 = vmatprep.subr.bf16.mxu0 0
        %666 = vmatpush1.bf16.msra.mxu0 %v650
        %667 = vmatprep.subr.bf16.mxu0 0
        %668 = vmatpush1.bf16.msra.mxu0 %v651
        %669 = vmatprep.subr.bf16.mxu0 0
        %670 = vmatpush1.bf16.msra.mxu0 %v652
        %671 = vmatprep.subr.bf16.mxu0 0
        %672 = vmatpush1.bf16.msra.mxu0 %v653
        %673 = vmatprep.subr.bf16.mxu0 0
        %674 = vmatpush1.bf16.msra.mxu0 %v663
        %675 = vmatprep.subr.bf16.mxu0 0
        %676 = vmatpush1.bf16.msra.mxu0 0
        %677 = vmatprep.subr.bf16.mxu0 0
        %678 = vmatpush1.bf16.msra.mxu0 0
        %679 = vmatprep.subr.bf16.mxu0 0
        %680 = vmatpush1.bf16.msra.mxu0 0
        %681 = vmatprep.subr.bf16.mxu0 0
        %682 = vmatpush1.bf16.msra.mxu0 0
        %683 = vmatprep.subr.bf16.mxu0 0
        %684 = vmatpush1.bf16.msra.mxu0 0
        %685 = vmatprep.subr.bf16.mxu0 0
        %686 = vmatpush1.bf16.msra.mxu0 0
        %687 = vmatprep.subr.bf16.mxu0 0
        %688 = vmatpush1.bf16.msra.mxu0 0
        %689 = vmatprep.subr.bf16.mxu0 0
        %690 = vmatpush1.bf16.msra.mxu0 0
        %691 = vmatprep.subr.bf16.mxu0 0
        %692 = vmatpush1.bf16.msra.mxu0 0
        %693 = vmatprep.subr.bf16.mxu0 0
        %694 = vmatpush1.bf16.msra.mxu0 0
        %695 = vmatprep.subr.bf16.mxu0 0
        %696 = vmatpush1.bf16.msra.mxu0 0
        %697 = vmatprep.mubr.bf16.mxu0 0
        %698 = vmatmul.mubr.bf16.gmra.mrb[0].mxu0 %v660
        %v699 = vpop.f32.mrb[0].mxu0
        %v700 = vadd.f32 %v626, %v699
        %v701 = vpop.f32.mrb[0].mxu0
        %v702 = vpop.f32.mrb[0].mxu0
        %v703 = vadd.f32 %v629, %v702
        %v704 = vpop.f32.mrb[0].mxu0
        %705 = vdwg.mxu0
        %v706 = vld [vmem:[#allocation3 + $0x2] sm:$0xff]
        %v707 = vld [vmem:[#allocation3 + $0xa] sm:$0xff]
        %v708 = vpack.c.bf16 %v707, %v706
        %s709 = scalar_lea.vmem %s2, 72
        %v710 = vld [vmem:[%s709] sm:$0xf]
        %v711 = vld [vmem:[%s709 + $0x4] sm:$0xf]
        %v712 = vld [vmem:[%s709 + $0x8] sm:$0xf]
        %v713 = vld [vmem:[%s709 + $0xc] sm:$0xf]
        %v714 = vld [vmem:[%s709 + $0x10] sm:$0xf]
        %v715 = vld [vmem:[%s709 + $0x14] sm:$0xf]
        %v716 = vld [vmem:[%s709 + $0x18] sm:$0xf]
        %v717 = vld [vmem:[%s709 + $0x1c] sm:$0xf]
        %v718 = vld [vmem:[%s709 + $0x20] sm:$0xf]
        %v728 = vunpack.c.l.b16 %v710
        %v729 = vunpack.c.l.b16 %v711
        %v730 = vunpack.c.l.b16 %v712
        %v731 = vunpack.c.l.b16 %v713
        %v732 = vunpack.c.l.b16 %v714
        %v733 = vunpack.c.l.b16 %v715
        %v734 = vunpack.c.l.b16 %v716
        %v735 = vunpack.c.l.b16 %v717
        %v736 = vunpack.c.l.b16 %v718
        %v737 = vpack.c.b16 %v729, %v728
        %v738 = vpack.c.b16 %v731, %v730
        %v739 = vpack.c.b16 %v733, %v732
        %v740 = vpack.c.b16 %v735, %v734
        %v741 = vpack.c.b16 %v736, %v736
        %v747 = vsel %vm227, %v708, 0
        %v750 = vsel %vm304, %v741, 0
        %752 = vmatprep.subr.bf16.mxu0 0
        %753 = vmatpush1.bf16.msra.mxu0 %v737
        %754 = vmatprep.subr.bf16.mxu0 0
        %755 = vmatpush1.bf16.msra.mxu0 %v738
        %756 = vmatprep.subr.bf16.mxu0 0
        %757 = vmatpush1.bf16.msra.mxu0 %v739
        %758 = vmatprep.subr.bf16.mxu0 0
        %759 = vmatpush1.bf16.msra.mxu0 %v740
        %760 = vmatprep.subr.bf16.mxu0 0
        %761 = vmatpush1.bf16.msra.mxu0 %v750
        %762 = vmatprep.subr.bf16.mxu0 0
        %763 = vmatpush1.bf16.msra.mxu0 0
        %764 = vmatprep.subr.bf16.mxu0 0
        %765 = vmatpush1.bf16.msra.mxu0 0
        %766 = vmatprep.subr.bf16.mxu0 0
        %767 = vmatpush1.bf16.msra.mxu0 0
        %768 = vmatprep.subr.bf16.mxu0 0
        %769 = vmatpush1.bf16.msra.mxu0 0
        %770 = vmatprep.subr.bf16.mxu0 0
        %771 = vmatpush1.bf16.msra.mxu0 0
        %772 = vmatprep.subr.bf16.mxu0 0
        %773 = vmatpush1.bf16.msra.mxu0 0
        %774 = vmatprep.subr.bf16.mxu0 0
        %775 = vmatpush1.bf16.msra.mxu0 0
        %776 = vmatprep.subr.bf16.mxu0 0
        %777 = vmatpush1.bf16.msra.mxu0 0
        %778 = vmatprep.subr.bf16.mxu0 0
        %779 = vmatpush1.bf16.msra.mxu0 0
        %780 = vmatprep.subr.bf16.mxu0 0
        %781 = vmatpush1.bf16.msra.mxu0 0
        %782 = vmatprep.subr.bf16.mxu0 0
        %783 = vmatpush1.bf16.msra.mxu0 0
        %784 = vmatprep.mubr.bf16.mxu0 0
        %785 = vmatmul.mubr.bf16.gmra.mrb[0].mxu0 %v747
        %v786 = vpop.f32.mrb[0].mxu0
        %v787 = vadd.f32 0.0, %v786
        %v788 = vpop.f32.mrb[0].mxu0
        %v789 = vpop.f32.mrb[0].mxu0
        %v790 = vadd.f32 0.0, %v789
        %v791 = vpop.f32.mrb[0].mxu0
        %792 = vdwg.mxu0
        %v793 = vadd.f32 %v700, %v787
        %v794 = vadd.f32 %v703, %v790
        %v796 = vlaneseq
        %v797 = vshrl.u32 %v796, 7
        %v798 = vsub.s32 0, %v797
        %v799 = vrot.slane %v532, %v798
        %v801 = vadd.f32 %v793, %v799
        %v802 = vadd.f32 %v794, %v799
        %v803 = vld [vmem:[%s223] sm:$0xff]
        %v804 = vld [vmem:[%s223 + $0x8] sm:$0xff]
        %v805 = vadd.f32 %v801, %v803
        %v806 = vadd.f32 %v802, %v804
        %v807 = vmax.f32 %v805, 0.0
        %v808 = vmax.f32 %v806, 0.0
        %vm809 = vcmask 523264
        %810 = vst.msk [vmem:[%s218] sm:$0xff] %vm809, %v807
        %811 = vst.msk [vmem:[%s218 + $0x8] sm:$0xff] %vm809, %v808
        %s812 = sand.u32 %s137, 1
        %s813 = scalar_lea.sflag [#allocation5], %s812
        %s814 = sand.u32 %s137, 1
        %s815 = smul.addr %s814, 16
        %s816 = scalar_lea.vmem [#allocation4], %s815
        // Predicated region
        $region41: #{tpu_custom_call.1} parent=39 // pred_check
          %p817 = pneg %p147
        $region42: #{tpu_custom_call.1} parent=39 // pred_check_branch
          %819 = sbr.rel (%p817) target = $region44
        $region43: #{tpu_custom_call.1} parent=39 // pred_region
          %s820 = smul.u32 2, %s19
          %s822 = ssub.s32 256, 256
          %823 = vsyncadd %s813, %s822
          %s824 = smul.addr %s820, 128
          %s825 = scalar_lea.hbm %s5, %s824
          %s826 = sshll.u32 %s816, 4
          %s827 = int_to_ptr.vmem [resolvable:$true] %s826
          %832 = dma.vmem_to_hbm [thread:$0]  %s827, 256, %s825, %s813, 128, 128, 8
        $region44: #{tpu_custom_call.1} parent=39 // pred_fallthru
          _
      $region40: #{tpu_custom_call.1} parent=5 // pred_fallthru
        _
      %p833 = scmp.le.s32.totalorder 2, %s14
      // Predicated region
      $region45: #{tpu_custom_call.1} parent=5 // pred_check
        %p834 = pneg %p833
      $region46: #{tpu_custom_call.1} parent=5 // pred_check_branch
        %836 = sbr.rel (%p834) target = $region48
      $region47: #{tpu_custom_call.1} parent=5 // pred_region
        %s837 = ssub.s32 %s14, 2
        // Predicated region
        $region49: #{tpu_custom_call.1} parent=47 // pred_check
          %p838 = pneg %p153
        $region50: #{tpu_custom_call.1} parent=47 // pred_check_branch
          %840 = sbr.rel (%p838) target = $region52
        $region51: #{tpu_custom_call.1} parent=47 // pred_region
          %s841 = sand.u32 %s138, 1
          %s842 = scalar_lea.sflag [#allocation5], %s841
          %s843 = sand.u32 %s138, 1
          %s844 = smul.addr %s843, 16
          %s845 = scalar_lea.vmem [#allocation4], %s844
          %846 = dma.done %s842, 256
        $region52: #{tpu_custom_call.1} parent=47 // pred_fallthru
          _
      $region48: #{tpu_custom_call.1} parent=5 // pred_fallthru
        _
    $region6: #{tpu_custom_call.1} parent=1 // loop_footer
      %s18 = sadd.s32 1, %s14
    $region7: #{tpu_custom_call.1} parent=1 // loop_footer_branch
      %13 = sbr.rel target = $region3
    $region8: #{tpu_custom_call.1} parent=1 // loop_exit
      _
    %847 = vsyncpa [#allocation5], 1
    %s848 = scalar_lea.sflag [#allocation5], 1
    %849 = vsyncpa %s848, 1

</llo_original>
